<compile_context>
chip_gen: v5e
topology: v5e:2x2
jax: 0.10.0
libtpu: 0.0.40
codegen_flags: <defaults>
</compile_context>

<pallas_src>
import jax
import jax.numpy as jnp
from jax.experimental import pallas as pl
from jax.experimental.pallas import tpu as pltpu

# Streamed-block VMEM budget (double-buffered x-in + y-out tiles). Sized
# against the smallest default scoped-VMEM limit across generations
# (v5e: 16 MiB, v6e/v7x: 32 MiB) with headroom for the resident weight/bias
# blocks and Mosaic internal scratch.
_VMEM_STREAM_BUDGET = 12 * 1024 * 1024


def _choose_tiles(B, Cin, Cout, HW, itemsize):
    """Pick (batch_block, spatial_tile) from the VMEM budget.

    Streamed bytes per lane per grid step = 2 buffers * (Cin + Cout) * itemsize
    (activation input + output, both double-buffered by the pipeline).
    """
    per_lane = 2 * (Cin + Cout) * itemsize
    max_lanes = max(_VMEM_STREAM_BUDGET // per_lane, 128)

    # Spatial tile: largest multiple of 128 that fits the budget, capped at the
    # largest multiple of 128 inside HW (ragged tail handled by the cdiv grid
    # and Pallas masking).  HW < 128 -> full-extent block (always legal).
    if HW <= 128:
        thw = HW
    else:
        thw = min((max_lanes // 128) * 128, (HW // 128) * 128)
        thw = max(thw, 128)

    # Batch blocking: when a whole image fits one spatial tile, pack several
    # batch elements per grid step so per-step bytes stay large (amortizes the
    # ~0.35 us fixed per-step pipeline overhead for small-HW workloads).
    bblk = 1
    if B > 1 and thw >= HW:
        cap = max(int(max_lanes // max(thw, 1)), 1)
        bblk = max(d for d in range(1, min(B, cap) + 1) if B % d == 0)

    # Keep >= 2 grid steps along a "parallel" axis so v7x's second TensorCore
    # gets work (harmless on 1-TC v5e/v6e).
    n_spatial = -(-HW // thw)
    if (B // bblk) * n_spatial < 2:
        if bblk > 1:
            bblk = max(d for d in range(1, bblk) if B % d == 0)
        elif n_spatial == 1 and thw >= 256:
            thw = max(((thw // 2) // 128) * 128, 128)
    return bblk, thw


def _make_kernel(bblk):
    """Fused 1x1-conv kernel (matmul + bias epilogue), specialized on bblk."""
    if bblk == 1:
        def kernel(x_ref, w_ref, b_ref, o_ref):
            # x_ref: (1, Cin, thw)  w_ref: (Cout, Cin)  b_ref: (Cout, 1)
            y = jnp.dot(w_ref[...], x_ref[0],
                        preferred_element_type=jnp.float32,
                        precision=jax.lax.Precision.HIGHEST)
            o_ref[0] = (y + b_ref[...]).astype(o_ref.dtype)
    else:
        def kernel(x_ref, w_ref, b_ref, o_ref):
            # x_ref: (bblk, Cin, thw) -> batched channel mix on the MXU.
            y = jnp.einsum("oc,bcs->bos", w_ref[...], x_ref[...],
                           preferred_element_type=jnp.float32,
                           precision=jax.lax.Precision.HIGHEST)
            o_ref[...] = (y + b_ref[...][None]).astype(o_ref.dtype)
    return kernel


def out_conv(x_nchw, w_oc, bias):
    """1x1 conv: (B, Cin, H, W) x (Cout, Cin) + (Cout,) -> (B, Cout, H, W)."""
    B, Cin, H, W = x_nchw.shape
    Cout = w_oc.shape[0]
    HW = H * W
    bblk, thw = _choose_tiles(B, Cin, Cout, HW, x_nchw.dtype.itemsize)

    x3 = x_nchw.reshape(B, Cin, HW)          # pure view: keeps NCHW layout
    b2 = bias.reshape(Cout, 1)

    grid = (B // bblk, pl.cdiv(HW, thw))

    out_bytes = B * Cout * HW * x_nchw.dtype.itemsize
    cost = pl.CostEstimate(
        flops=2 * B * HW * Cin * Cout,
        transcendentals=0,
        bytes_accessed=(x3.size * x3.dtype.itemsize
                        + w_oc.size * w_oc.dtype.itemsize
                        + bias.size * bias.dtype.itemsize
                        + out_bytes))

    out = pl.pallas_call(
        _make_kernel(bblk),
        # Output dtype follows the input (perf-review item: halves writeback
        # traffic for bf16 activations; matches what the surrounding model
        # expects).
        out_shape=jax.ShapeDtypeStruct((B, Cout, HW), x_nchw.dtype),
        grid_spec=pltpu.PrefetchScalarGridSpec(
            num_scalar_prefetch=0,
            grid=grid,
            in_specs=[
                pl.BlockSpec((bblk, Cin, thw), lambda b, s: (b, 0, s)),
                pl.BlockSpec((Cout, Cin), lambda b, s: (0, 0)),   # resident
                pl.BlockSpec((Cout, 1), lambda b, s: (0, 0)),     # resident
            ],
            out_specs=pl.BlockSpec((bblk, Cout, thw), lambda b, s: (b, 0, s)),
        ),
        compiler_params=pltpu.CompilerParams(
            dimension_semantics=("parallel", "parallel")),
        cost_estimate=cost,
    )(x3, w_oc, b2)
    return out.reshape(B, Cout, H, W)


def out_conv_forward(x_nchw, params):
    return out_conv(x_nchw, params["w"], params["b"])


def init_params(key, in_channels, out_channels):
    # Matches torch Conv2d(kernel_size=1) default init; weight is stored
    # pre-squeezed as (Cout, Cin) so the jitted forward never transposes,
    # reshapes, or pads it.
    kw, kb = jax.random.split(key)
    bound = 1.0 / float(in_channels) ** 0.5     # fan_in = Cin * 1 * 1
    w = jax.random.uniform(kw, (out_channels, in_channels), jnp.float32,
                           -bound, bound)
    b = jax.random.uniform(kb, (out_channels,), jnp.float32, -bound, bound)
    return {"w": w, "b": b}


if __name__ == "__main__":
    batch, in_channels, out_channels, spatial = 2, 4, 3, 16
    key = jax.random.PRNGKey(0)
    k_params, k_x = jax.random.split(key)
    params = init_params(k_params, in_channels, out_channels)
    x = jax.random.normal(k_x, (batch, in_channels, spatial, spatial),
                          jnp.float32)

    out = jax.jit(out_conv_forward)(x, params)
    out = jax.block_until_ready(out)

    assert out.shape == (batch, out_channels, spatial, spatial), out.shape
    assert out.dtype == x.dtype, out.dtype
    assert bool(jnp.all(jnp.isfinite(out)))

    # Plain-JAX reference.
    ref = (jnp.einsum("bchw,oc->bohw", x, params["w"])
           + params["b"][None, :, None, None])
    assert bool(jnp.allclose(out, ref, atol=1e-2, rtol=1e-2)), \
        float(jnp.max(jnp.abs(out - ref)))

    print("KERNEL_OK")
</pallas_src>

<mosaic_0001>
module attributes {stable_mosaic.version = 11 : i64} {
  func.func @kernel(%arg0: i32, %arg1: i32, %arg2: memref<1x4x256xf32, #tpu.memory_space<vmem>>, %arg3: memref<3x4xf32, #tpu.memory_space<vmem>>, %arg4: memref<3x1xf32, #tpu.memory_space<vmem>>, %arg5: memref<1x3x256xf32, #tpu.memory_space<vmem>>) attributes {dimension_semantics = [#tpu.dimension_semantics<parallel>, #tpu.dimension_semantics<parallel>], iteration_bounds = array<i64: 2, 1>, scalar_prefetch = 0 : i64, scratch_operands = 0 : i64, tpu.core_type = #tpu.core_type<tc>, window_params = [{transform_indices = @transform_0, window_bounds = array<i64: 1, 4, 256>}, {pipeline_mode = #tpu.pipeline_mode<synchronous>, transform_indices = @transform_1, window_bounds = array<i64: 3, 4>}, {pipeline_mode = #tpu.pipeline_mode<synchronous>, transform_indices = @transform_2, window_bounds = array<i64: 3, 1>}, {transform_indices = @transform_3, window_bounds = array<i64: 1, 3, 256>}]} {
    %c0 = arith.constant 0 : index
    %c0_0 = arith.constant 0 : index
    %0 = vector.load %arg3[%c0, %c0_0] : memref<3x4xf32, #tpu.memory_space<vmem>>, vector<3x4xf32>
    %c0_1 = arith.constant 0 : index
    %c0_2 = arith.constant 0 : index
    %c0_3 = arith.constant 0 : index
    %1 = vector.load %arg2[%c0_1, %c0_2, %c0_3] : memref<1x4x256xf32, #tpu.memory_space<vmem>>, vector<1x4x256xf32>
    %2 = vector.shape_cast %1 : vector<1x4x256xf32> to vector<4x256xf32>
    %cst = arith.constant dense<0.000000e+00> : vector<3x256xf32>
    %3 = tpu.matmul %0, %2, %cst {dimension_numbers = #tpu.dot_dimension_numbers<[1], [0], [0], [1], [0, 0, 1, 1], [], []>, precision = #tpu.contract_precision<fp32>} : vector<3x4xf32>, vector<4x256xf32>, vector<3x256xf32> -> vector<3x256xf32>
    %c0_4 = arith.constant 0 : index
    %c0_5 = arith.constant 0 : index
    %4 = vector.load %arg4[%c0_4, %c0_5] : memref<3x1xf32, #tpu.memory_space<vmem>>, vector<3x1xf32>
    %5 = vector.broadcast %4 : vector<3x1xf32> to vector<3x256xf32>
    %6 = arith.addf %3, %5 : vector<3x256xf32>
    %c0_6 = arith.constant 0 : index
    %c0_7 = arith.constant 0 : index
    %c0_8 = arith.constant 0 : index
    %7 = vector.load %arg5[%c0_6, %c0_7, %c0_8] : memref<1x3x256xf32, #tpu.memory_space<vmem>>, vector<1x3x256xf32>
    %8 = vector.shape_cast %7 : vector<1x3x256xf32> to vector<3x256xf32>
    %9 = vector.shape_cast %6 : vector<3x256xf32> to vector<1x3x256xf32>
    tpu.vector_store %arg5[%c0_6, %c0_7, %c0_8], %9 {strides = array<i32>} : memref<1x3x256xf32, #tpu.memory_space<vmem>>, vector<1x3x256xf32>,
    return
  }
  func.func @transform_0(%arg0: i32, %arg1: i32) -> (i32, i32, i32) {
    %c0_i32 = arith.constant 0 : i32
    %c0_i32_0 = arith.constant 0 : i32
    return %arg0, %c0_i32, %arg1 : i32, i32, i32
  }
  func.func @transform_1(%arg0: i32, %arg1: i32) -> (i32, i32) {
    %c0_i32 = arith.constant 0 : i32
    %c0_i32_0 = arith.constant 0 : i32
    %c0_i32_1 = arith.constant 0 : i32
    return %c0_i32, %c0_i32_0 : i32, i32
  }
  func.func @transform_2(%arg0: i32, %arg1: i32) -> (i32, i32) {
    %c0_i32 = arith.constant 0 : i32
    %c0_i32_0 = arith.constant 0 : i32
    %c0_i32_1 = arith.constant 0 : i32
    return %c0_i32, %c0_i32_0 : i32, i32
  }
  func.func @transform_3(%arg0: i32, %arg1: i32) -> (i32, i32, i32) {
    %c0_i32 = arith.constant 0 : i32
    %c0_i32_0 = arith.constant 0 : i32
    return %arg0, %c0_i32, %arg1 : i32, i32, i32
  }
}

</mosaic_0001>

<llo_original>
// kernel: out_conv_forward.1
$region0: #{out_conv_forward.1}
  #allocation0 [shape = 'u32[]', space=smem, size = 0x4, offset = 0x4, fixed_abs, tag = 'smem constant byte address 0x4 - core index']
  #allocation1 [shape = 'u32[72,128]{1,0:T(1,128)}', space=vmem, size = 0x9000, scoped, tag = 'internal scratch']
  %s0 = inlined_call_operand.vmem [shape: f32[2,4,256], index: 0, kind: input, shape index: {}]
  %s1 = inlined_call_operand.vmem [shape: f32[3,4], index: 1, kind: input, shape index: {}]
  %s2 = inlined_call_operand.vmem [shape: f32[3,1], index: 2, kind: input, shape index: {}]
  %s3 = inlined_call_operand.vmem [shape: f32[2,3,256], index: 3, kind: output, shape index: {}]
  %s4 = sld [smem:[#allocation0]]
  $region45: #{out_conv_forward.1} parent=0
    _
  %s6 = ssub.s32 1, %s4
  %s7 = scalar_select 0, %s6, %s4
  loop: start=0, step=1, limit=4
  $region2: #{out_conv_forward.1} parent=0 // loop_pre_header
    _
  $region3: #{out_conv_forward.1} parent=0 // loop_header
    %s9 = sphi 0, %s13
    %p10 = scmp.ge.s32.totalorder %s9, 4
    %s16 = sphi 0, %s28
    %s17 = sphi 0, %s24
    %s18 = sphi 0, %s16
    %s19 = sphi 0, %s17
    %s20 = sphi 0, %s18
    %s21 = sphi 0, %s19
    %s33 = sphi 0, %s35
    %s36 = sphi 0, %s33
    %s37 = sphi 0, %s36
    %s53 = sphi 0, %s37
    %s57 = sphi 0, %s57
    %s59 = sphi 0, %s57
    %s60 = sphi 0, %s59
    %s74 = sphi 0, %s60
    %s78 = sphi 0, %s78
    %s80 = sphi 0, %s78
    %s81 = sphi 0, %s80
    %s95 = sphi 0, %s81
    %s103 = sphi 0, %s105
    %s106 = sphi 0, %s103
    %s107 = sphi 0, %s106
    %s123 = sphi 0, %s107
  $region4: #{out_conv_forward.1} parent=0 // loop_header_branch
    %12 = sbr.rel (%p10) target = $region8
  $region5: #{out_conv_forward.1} parent=0 // loop_body
    %s14 = ssub.s32 %s9, 1
    %s15 = ssub.s32 %s9, 2
    %s22 = sadd.s32 1, %s17
    %p23 = scmp.ge.s32.totalorder %s22, 1
    %s24 = scalar_select %p23, 0, %s22
    %s25 = sadd.s32 1, %s16
    %s26 = scalar_select %p23, %s25, %s16
    %p27 = scmp.ge.s32.totalorder %s26, 2
    %s28 = scalar_select %p27, 0, %s26
    %s29 = ssub.s32 %s16, %s28
    %s30 = ssub.s32 %s17, %s24
    %s31 = sor.u32 %s29, %s30
    %p32 = scmp.eq.s32.totalorder %s31, 0
    %s34 = sadd.s32 %s33, 1
    %s35 = scalar_select %p32, %s33, %s34
    %p38 = pneg %p32
    %p39 = scmp.eq.s32.totalorder %s9, 1
    %p40 = por %p38, %p39
    %p41 = scmp.ne.s32.totalorder %s33, %s36
    %p42 = scmp.eq.s32.totalorder %s9, 0
    %p43 = por %p41, %p42
    %p44 = scmp.ne.s32.totalorder %s33, %s36
    %p45 = scmp.eq.s32.totalorder %s14, 1
    %p46 = por %p44, %p45
    %p47 = scmp.ne.s32.totalorder %s36, %s37
    %p48 = scmp.eq.s32.totalorder %s14, 0
    %p49 = por %p47, %p48
    %p50 = scmp.ne.s32.totalorder %s36, %s37
    %p51 = scmp.eq.s32.totalorder %s15, 1
    %p52 = por %p50, %p51
    %p54 = scmp.ne.s32.totalorder %s37, %s53
    %p55 = scmp.eq.s32.totalorder %s15, 0
    %p56 = por %p54, %p55
    %s58 = sadd.s32 %s57, 1
    %p61 = scmp.eq.s32.totalorder %s9, 1
    %p62 = scmp.ne.s32.totalorder %s57, %s59
    %p63 = scmp.eq.s32.totalorder %s9, 0
    %p64 = por %p62, %p63
    %p65 = scmp.ne.s32.totalorder %s57, %s59
    %p66 = scmp.eq.s32.totalorder %s14, 1
    %p67 = por %p65, %p66
    %p68 = scmp.ne.s32.totalorder %s59, %s60
    %p69 = scmp.eq.s32.totalorder %s14, 0
    %p70 = por %p68, %p69
    %p71 = scmp.ne.s32.totalorder %s59, %s60
    %p72 = scmp.eq.s32.totalorder %s15, 1
    %p73 = por %p71, %p72
    %p75 = scmp.ne.s32.totalorder %s60, %s74
    %p76 = scmp.eq.s32.totalorder %s15, 0
    %p77 = por %p75, %p76
    %s79 = sadd.s32 %s78, 1
    %p82 = scmp.eq.s32.totalorder %s9, 1
    %p83 = scmp.ne.s32.totalorder %s78, %s80
    %p84 = scmp.eq.s32.totalorder %s9, 0
    %p85 = por %p83, %p84
    %p86 = scmp.ne.s32.totalorder %s78, %s80
    %p87 = scmp.eq.s32.totalorder %s14, 1
    %p88 = por %p86, %p87
    %p89 = scmp.ne.s32.totalorder %s80, %s81
    %p90 = scmp.eq.s32.totalorder %s14, 0
    %p91 = por %p89, %p90
    %p92 = scmp.ne.s32.totalorder %s80, %s81
    %p93 = scmp.eq.s32.totalorder %s15, 1
    %p94 = por %p92, %p93
    %p96 = scmp.ne.s32.totalorder %s81, %s95
    %p97 = scmp.eq.s32.totalorder %s15, 0
    %p98 = por %p96, %p97
    %s99 = ssub.s32 %s16, %s28
    %s100 = ssub.s32 %s17, %s24
    %s101 = sor.u32 %s99, %s100
    %p102 = scmp.eq.s32.totalorder %s101, 0
    %s104 = sadd.s32 %s103, 1
    %s105 = scalar_select %p102, %s103, %s104
    %p108 = pneg %p102
    %p109 = scmp.eq.s32.totalorder %s9, 1
    %p110 = por %p108, %p109
    %p111 = scmp.ne.s32.totalorder %s103, %s106
    %p112 = scmp.eq.s32.totalorder %s9, 0
    %p113 = por %p111, %p112
    %p114 = scmp.ne.s32.totalorder %s103, %s106
    %p115 = scmp.eq.s32.totalorder %s14, 1
    %p116 = por %p114, %p115
    %p117 = scmp.ne.s32.totalorder %s106, %s107
    %p118 = scmp.eq.s32.totalorder %s14, 0
    %p119 = por %p117, %p118
    %p120 = scmp.ne.s32.totalorder %s106, %s107
    %p121 = scmp.eq.s32.totalorder %s15, 1
    %p122 = por %p120, %p121
    %p124 = scmp.ne.s32.totalorder %s107, %s123
    %p125 = scmp.eq.s32.totalorder %s15, 0
    %p126 = por %p124, %p125
    %p127 = scmp.le.s32.totalorder 1, %s9
    %p128 = scmp.lt.s32.totalorder %s9, 3
    %p129 = pnand %p127, %p128
    %p130 = pneg %p129
    // Predicated region
    $region9: #{out_conv_forward.1} parent=5 // pred_check
      _
    $region10: #{out_conv_forward.1} parent=5 // pred_check_branch
      %132 = sbr.rel (%p129) target = $region12
    $region11: #{out_conv_forward.1} parent=5 // pred_region
      %s133 = ssub.s32 %s9, 1
      // Predicated region
      $region13: #{out_conv_forward.1} parent=11 // pred_check
        %p134 = pneg %p70
      $region14: #{out_conv_forward.1} parent=11 // pred_check_branch
        %136 = sbr.rel (%p134) target = $region16
      $region15: #{out_conv_forward.1} parent=11 // pred_region
        _
      $region16: #{out_conv_forward.1} parent=11 // pred_fallthru
        _
      // Predicated region
      $region17: #{out_conv_forward.1} parent=11 // pred_check
        %p137 = pneg %p91
      $region18: #{out_conv_forward.1} parent=11 // pred_check_branch
        %139 = sbr.rel (%p137) target = $region20
      $region19: #{out_conv_forward.1} parent=11 // pred_region
        _
      $region20: #{out_conv_forward.1} parent=11 // pred_fallthru
        _
    $region12: #{out_conv_forward.1} parent=5 // pred_fallthru
      _
    %p140 = scmp.lt.s32.totalorder %s9, 2
    // Predicated region
    $region21: #{out_conv_forward.1} parent=5 // pred_check
      %p141 = pneg %p140
    $region22: #{out_conv_forward.1} parent=5 // pred_check_branch
      %143 = sbr.rel (%p141) target = $region24
    $region23: #{out_conv_forward.1} parent=5 // pred_region
      // Predicated region
      $region25: #{out_conv_forward.1} parent=23 // pred_check
        %p144 = pneg %p43
      $region26: #{out_conv_forward.1} parent=23 // pred_check_branch
        %146 = sbr.rel (%p144) target = $region28
      $region27: #{out_conv_forward.1} parent=23 // pred_region
        %s147 = smul.u32 2, %s17
        %p148 = scmp.lt.s32.totalorder %s16, 1
        %s149 = scalar_select %p148, %s16, 1
        %p150 = scmp.lt.s32.totalorder %s147, 1
        %s151 = scalar_select %p150, %s147, 1
        %s152 = smul.addr %s149, 2
        %s153 = sadd.s32 %s151, %s152
        %s154 = smul.addr %s153, 4
        %s155 = scalar_lea.vmem %s0, %s154
        %s156 = smul.u32 2, %s17
      $region28: #{out_conv_forward.1} parent=23 // pred_fallthru
        _
    $region24: #{out_conv_forward.1} parent=5 // pred_fallthru
      _
    %p157 = scmp.le.s32.totalorder 1, %s9
    %p158 = scmp.lt.s32.totalorder %s9, 3
    %p159 = pnand %p157, %p158
    %p160 = pneg %p159
    // Predicated region
    $region29: #{out_conv_forward.1} parent=5 // pred_check
      _
    $region30: #{out_conv_forward.1} parent=5 // pred_check_branch
      %162 = sbr.rel (%p159) target = $region32
    $region31: #{out_conv_forward.1} parent=5 // pred_region
      %s163 = ssub.s32 %s9, 1
      %s164 = smul.u32 2, %s19
      %p165 = scmp.lt.s32.totalorder %s18, 1
      %s166 = scalar_select %p165, %s18, 1
      %p167 = scmp.lt.s32.totalorder %s164, 1
      %s168 = scalar_select %p167, %s164, 1
      %s169 = smul.addr %s166, 2
      %s170 = sadd.s32 %s168, %s169
      %s171 = smul.addr %s170, 4
      %s172 = scalar_lea.vmem %s0, %s171
      %p173 = pneg %p49
      %p174 = pneg %p46
      %p175 = pneg %p70
      %p176 = pneg %p67
      %p177 = pneg %p91
      %p178 = pneg %p88
      %p179 = pneg %p119
      %p180 = pneg %p116
      %s181 = smul.u32 2, %s19
      %p182 = scmp.lt.s32.totalorder %s18, 1
      %s183 = scalar_select %p182, %s18, 1
      %p184 = scmp.lt.s32.totalorder %s181, 1
      %s185 = scalar_select %p184, %s181, 1
      %s186 = smul.addr %s183, 2
      %s187 = sadd.s32 %s185, %s186
      %s188 = smul.addr %s187, 4
      %s189 = scalar_lea.vmem %s3, %s188
      %s190 = smul.u32 2, %s19
      %p191 = scmp.lt.s32.totalorder %s18, 1
      %s192 = scalar_select %p191, %s18, 1
      %p193 = scmp.lt.s32.totalorder %s190, 1
      %s194 = scalar_select %p193, %s190, 1
      %s195 = smul.addr %s192, 2
      %s196 = sadd.s32 %s194, %s195
      %s197 = smul.addr %s196, 4
      %s198 = scalar_lea.vmem %s0, %s197
      %s199 = smul.u32 2, %s19
      %s200 = smul.u32 2, %s19
      %p201 = scmp.lt.s32.totalorder %s18, 1
      %s202 = scalar_select %p201, %s18, 1
      %p203 = scmp.lt.s32.totalorder %s200, 1
      %s204 = scalar_select %p203, %s200, 1
      %s205 = smul.addr %s202, 2
      %s206 = sadd.s32 %s204, %s205
      %s207 = smul.addr %s206, 4
      %s208 = scalar_lea.vmem %s3, %s207
      %s209 = smul.u32 2, %s19
      %v210 = vld [vmem:[%s1] sm:$0x7]
      %v211 = vld [vmem:[%s198] sm:$0xff]
      %v212 = vld [vmem:[%s2] sm:$0x7]
      %214 = vset.pattern.permute.xlu0 0
      %215 = vperm.xlu0 %214, %v212
      %v216 = vpop.permute.xlu0 %215
      %219 = vst [vmem:[#allocation1] ss:$2 sm:$0xff] %v211
      %v220 = vld.sshfl [vmem:[#allocation1] sm:$0xff pattern:$0x75316420]
      %v221 = vld.sshfl [vmem:[#allocation1 + $0x8] sm:$0xff pattern:$0x75316420]
      %vm222 = vcmask 31744
      %v224 = vsel %vm222, %v210, 0
      %vm226 = vcmask 1043456
      %v227 = vsel %vm226, %v220, 0
      %v229 = vsel %vm226, %v221, 0
      %231 = vmatpush.msra.mxu0 0.0
      %232 = vmatpush.msra.mxu0 0.0
      %233 = vmatpush.msra.mxu0 0.0
      %234 = vmatpush.msra.mxu0 0.0
      %235 = vmatpush.msra.mxu0 0.0
      %236 = vmatpush.msra.mxu0 0.0
      %237 = vmatpush.msra.mxu0 0.0
      %238 = vmatpush.msra.mxu0 0.0
      %239 = vmatpush.msra.mxu0 0.0
      %240 = vmatpush.msra.mxu0 0.0
      %241 = vmatpush.msra.mxu0 0.0
      %242 = vmatpush.msra.mxu0 0.0
      %243 = vmatpush.msra.mxu0 0.0
      %244 = vmatpush.msra.mxu0 0.0
      %245 = vmatpush.msra.mxu0 0.0
      %v246 = vand.u32 %v227, 4294901760
      %247 = vmatpush.msra.mxu0 %v246
      %v248 = vand.u32 %v224, 4294901760
      %v249 = vsub.f32 %v224, %v248
      %v250 = vand.u32 %v249, 4294901760
      %v251 = vsub.f32 %v249, %v250
      %v252 = vand.u32 %v251, 4294901760
      %253 = vmatmul.f32.gmra.mxu0 %v252
      %v254 = vpop.f32.mrf.mxu0
      %v255 = vadd.f32 %v216, %v254
      %256 = vdwg.mxu0
      %257 = vmatpush.msra.mxu0 0.0
      %258 = vmatpush.msra.mxu0 0.0
      %259 = vmatpush.msra.mxu0 0.0
      %260 = vmatpush.msra.mxu0 0.0
      %261 = vmatpush.msra.mxu0 0.0
      %262 = vmatpush.msra.mxu0 0.0
      %263 = vmatpush.msra.mxu0 0.0
      %264 = vmatpush.msra.mxu0 0.0
      %265 = vmatpush.msra.mxu0 0.0
      %266 = vmatpush.msra.mxu0 0.0
      %267 = vmatpush.msra.mxu0 0.0
      %268 = vmatpush.msra.mxu0 0.0
      %269 = vmatpush.msra.mxu0 0.0
      %270 = vmatpush.msra.mxu0 0.0
      %271 = vmatpush.msra.mxu0 0.0
      %v272 = vand.u32 %v227, 4294901760
      %v273 = vsub.f32 %v227, %v272
      %v274 = vand.u32 %v273, 4294901760
      %v275 = vsub.f32 %v273, %v274
      %v276 = vand.u32 %v275, 4294901760
      %277 = vmatpush.msra.mxu0 %v276
      %v278 = vand.u32 %v224, 4294901760
      %279 = vmatmul.f32.gmra.mxu0 %v278
      %v280 = vpop.f32.mrf.mxu0
      %v281 = vadd.f32 %v255, %v280
      %282 = vdwg.mxu0
      %283 = vmatpush.msra.mxu0 0.0
      %284 = vmatpush.msra.mxu0 0.0
      %285 = vmatpush.msra.mxu0 0.0
      %286 = vmatpush.msra.mxu0 0.0
      %287 = vmatpush.msra.mxu0 0.0
      %288 = vmatpush.msra.mxu0 0.0
      %289 = vmatpush.msra.mxu0 0.0
      %290 = vmatpush.msra.mxu0 0.0
      %291 = vmatpush.msra.mxu0 0.0
      %292 = vmatpush.msra.mxu0 0.0
      %293 = vmatpush.msra.mxu0 0.0
      %294 = vmatpush.msra.mxu0 0.0
      %295 = vmatpush.msra.mxu0 0.0
      %296 = vmatpush.msra.mxu0 0.0
      %297 = vmatpush.msra.mxu0 0.0
      %v298 = vand.u32 %v227, 4294901760
      %v299 = vsub.f32 %v227, %v298
      %300 = vmatpush.msra.mxu0 %v299
      %v301 = vand.u32 %v224, 4294901760
      %v302 = vsub.f32 %v224, %v301
      %303 = vmatmul.f32.gmra.mxu0 %v302
      %v304 = vpop.f32.mrf.mxu0
      %v305 = vadd.f32 %v281, %v304
      %306 = vdwg.mxu0
      %307 = vmatpush.msra.mxu0 0.0
      %308 = vmatpush.msra.mxu0 0.0
      %309 = vmatpush.msra.mxu0 0.0
      %310 = vmatpush.msra.mxu0 0.0
      %311 = vmatpush.msra.mxu0 0.0
      %312 = vmatpush.msra.mxu0 0.0
      %313 = vmatpush.msra.mxu0 0.0
      %314 = vmatpush.msra.mxu0 0.0
      %315 = vmatpush.msra.mxu0 0.0
      %316 = vmatpush.msra.mxu0 0.0
      %317 = vmatpush.msra.mxu0 0.0
      %318 = vmatpush.msra.mxu0 0.0
      %319 = vmatpush.msra.mxu0 0.0
      %320 = vmatpush.msra.mxu0 0.0
      %321 = vmatpush.msra.mxu0 0.0
      %v322 = vand.u32 %v227, 4294901760
      %323 = vmatpush.msra.mxu0 %v322
      %v324 = vand.u32 %v224, 4294901760
      %v325 = vsub.f32 %v224, %v324
      %v326 = vand.u32 %v325, 4294901760
      %327 = vmatmul.f32.gmra.mxu0 %v326
      %v328 = vpop.f32.mrf.mxu0
      %v329 = vadd.f32 %v305, %v328
      %330 = vdwg.mxu0
      %331 = vmatpush.msra.mxu0 0.0
      %332 = vmatpush.msra.mxu0 0.0
      %333 = vmatpush.msra.mxu0 0.0
      %334 = vmatpush.msra.mxu0 0.0
      %335 = vmatpush.msra.mxu0 0.0
      %336 = vmatpush.msra.mxu0 0.0
      %337 = vmatpush.msra.mxu0 0.0
      %338 = vmatpush.msra.mxu0 0.0
      %339 = vmatpush.msra.mxu0 0.0
      %340 = vmatpush.msra.mxu0 0.0
      %341 = vmatpush.msra.mxu0 0.0
      %342 = vmatpush.msra.mxu0 0.0
      %343 = vmatpush.msra.mxu0 0.0
      %344 = vmatpush.msra.mxu0 0.0
      %345 = vmatpush.msra.mxu0 0.0
      %v346 = vand.u32 %v227, 4294901760
      %v347 = vsub.f32 %v227, %v346
      %v348 = vand.u32 %v347, 4294901760
      %349 = vmatpush.msra.mxu0 %v348
      %v350 = vand.u32 %v224, 4294901760
      %351 = vmatmul.f32.gmra.mxu0 %v350
      %v352 = vpop.f32.mrf.mxu0
      %v353 = vadd.f32 %v329, %v352
      %354 = vdwg.mxu0
      %355 = vmatpush.msra.mxu0 0.0
      %356 = vmatpush.msra.mxu0 0.0
      %357 = vmatpush.msra.mxu0 0.0
      %358 = vmatpush.msra.mxu0 0.0
      %359 = vmatpush.msra.mxu0 0.0
      %360 = vmatpush.msra.mxu0 0.0
      %361 = vmatpush.msra.mxu0 0.0
      %362 = vmatpush.msra.mxu0 0.0
      %363 = vmatpush.msra.mxu0 0.0
      %364 = vmatpush.msra.mxu0 0.0
      %365 = vmatpush.msra.mxu0 0.0
      %366 = vmatpush.msra.mxu0 0.0
      %367 = vmatpush.msra.mxu0 0.0
      %368 = vmatpush.msra.mxu0 0.0
      %369 = vmatpush.msra.mxu0 0.0
      %v370 = vand.u32 %v227, 4294901760
      %371 = vmatpush.msra.mxu0 %v370
      %v372 = vand.u32 %v224, 4294901760
      %373 = vmatmul.f32.gmra.mxu0 %v372
      %v374 = vpop.f32.mrf.mxu0
      %v375 = vadd.f32 %v353, %v374
      %376 = vdwg.mxu0
      %377 = vmatpush.msra.mxu0 0.0
      %378 = vmatpush.msra.mxu0 0.0
      %379 = vmatpush.msra.mxu0 0.0
      %380 = vmatpush.msra.mxu0 0.0
      %381 = vmatpush.msra.mxu0 0.0
      %382 = vmatpush.msra.mxu0 0.0
      %383 = vmatpush.msra.mxu0 0.0
      %384 = vmatpush.msra.mxu0 0.0
      %385 = vmatpush.msra.mxu0 0.0
      %386 = vmatpush.msra.mxu0 0.0
      %387 = vmatpush.msra.mxu0 0.0
      %388 = vmatpush.msra.mxu0 0.0
      %389 = vmatpush.msra.mxu0 0.0
      %390 = vmatpush.msra.mxu0 0.0
      %391 = vmatpush.msra.mxu0 0.0
      %v392 = vand.u32 %v229, 4294901760
      %393 = vmatpush.msra.mxu0 %v392
      %v394 = vand.u32 %v224, 4294901760
      %v395 = vsub.f32 %v224, %v394
      %v396 = vand.u32 %v395, 4294901760
      %v397 = vsub.f32 %v395, %v396
      %v398 = vand.u32 %v397, 4294901760
      %399 = vmatmul.f32.gmra.mxu0 %v398
      %v400 = vpop.f32.mrf.mxu0
      %v401 = vadd.f32 %v216, %v400
      %402 = vdwg.mxu0
      %403 = vmatpush.msra.mxu0 0.0
      %404 = vmatpush.msra.mxu0 0.0
      %405 = vmatpush.msra.mxu0 0.0
      %406 = vmatpush.msra.mxu0 0.0
      %407 = vmatpush.msra.mxu0 0.0
      %408 = vmatpush.msra.mxu0 0.0
      %409 = vmatpush.msra.mxu0 0.0
      %410 = vmatpush.msra.mxu0 0.0
      %411 = vmatpush.msra.mxu0 0.0
      %412 = vmatpush.msra.mxu0 0.0
      %413 = vmatpush.msra.mxu0 0.0
      %414 = vmatpush.msra.mxu0 0.0
      %415 = vmatpush.msra.mxu0 0.0
      %416 = vmatpush.msra.mxu0 0.0
      %417 = vmatpush.msra.mxu0 0.0
      %v418 = vand.u32 %v229, 4294901760
      %v419 = vsub.f32 %v229, %v418
      %v420 = vand.u32 %v419, 4294901760
      %v421 = vsub.f32 %v419, %v420
      %v422 = vand.u32 %v421, 4294901760
      %423 = vmatpush.msra.mxu0 %v422
      %v424 = vand.u32 %v224, 4294901760
      %425 = vmatmul.f32.gmra.mxu0 %v424
      %v426 = vpop.f32.mrf.mxu0
      %v427 = vadd.f32 %v401, %v426
      %428 = vdwg.mxu0
      %429 = vmatpush.msra.mxu0 0.0
      %430 = vmatpush.msra.mxu0 0.0
      %431 = vmatpush.msra.mxu0 0.0
      %432 = vmatpush.msra.mxu0 0.0
      %433 = vmatpush.msra.mxu0 0.0
      %434 = vmatpush.msra.mxu0 0.0
      %435 = vmatpush.msra.mxu0 0.0
      %436 = vmatpush.msra.mxu0 0.0
      %437 = vmatpush.msra.mxu0 0.0
      %438 = vmatpush.msra.mxu0 0.0
      %439 = vmatpush.msra.mxu0 0.0
      %440 = vmatpush.msra.mxu0 0.0
      %441 = vmatpush.msra.mxu0 0.0
      %442 = vmatpush.msra.mxu0 0.0
      %443 = vmatpush.msra.mxu0 0.0
      %v444 = vand.u32 %v229, 4294901760
      %v445 = vsub.f32 %v229, %v444
      %446 = vmatpush.msra.mxu0 %v445
      %v447 = vand.u32 %v224, 4294901760
      %v448 = vsub.f32 %v224, %v447
      %449 = vmatmul.f32.gmra.mxu0 %v448
      %v450 = vpop.f32.mrf.mxu0
      %v451 = vadd.f32 %v427, %v450
      %452 = vdwg.mxu0
      %453 = vmatpush.msra.mxu0 0.0
      %454 = vmatpush.msra.mxu0 0.0
      %455 = vmatpush.msra.mxu0 0.0
      %456 = vmatpush.msra.mxu0 0.0
      %457 = vmatpush.msra.mxu0 0.0
      %458 = vmatpush.msra.mxu0 0.0
      %459 = vmatpush.msra.mxu0 0.0
      %460 = vmatpush.msra.mxu0 0.0
      %461 = vmatpush.msra.mxu0 0.0
      %462 = vmatpush.msra.mxu0 0.0
      %463 = vmatpush.msra.mxu0 0.0
      %464 = vmatpush.msra.mxu0 0.0
      %465 = vmatpush.msra.mxu0 0.0
      %466 = vmatpush.msra.mxu0 0.0
      %467 = vmatpush.msra.mxu0 0.0
      %v468 = vand.u32 %v229, 4294901760
      %469 = vmatpush.msra.mxu0 %v468
      %v470 = vand.u32 %v224, 4294901760
      %v471 = vsub.f32 %v224, %v470
      %v472 = vand.u32 %v471, 4294901760
      %473 = vmatmul.f32.gmra.mxu0 %v472
      %v474 = vpop.f32.mrf.mxu0
      %v475 = vadd.f32 %v451, %v474
      %476 = vdwg.mxu0
      %477 = vmatpush.msra.mxu0 0.0
      %478 = vmatpush.msra.mxu0 0.0
      %479 = vmatpush.msra.mxu0 0.0
      %480 = vmatpush.msra.mxu0 0.0
      %481 = vmatpush.msra.mxu0 0.0
      %482 = vmatpush.msra.mxu0 0.0
      %483 = vmatpush.msra.mxu0 0.0
      %484 = vmatpush.msra.mxu0 0.0
      %485 = vmatpush.msra.mxu0 0.0
      %486 = vmatpush.msra.mxu0 0.0
      %487 = vmatpush.msra.mxu0 0.0
      %488 = vmatpush.msra.mxu0 0.0
      %489 = vmatpush.msra.mxu0 0.0
      %490 = vmatpush.msra.mxu0 0.0
      %491 = vmatpush.msra.mxu0 0.0
      %v492 = vand.u32 %v229, 4294901760
      %v493 = vsub.f32 %v229, %v492
      %v494 = vand.u32 %v493, 4294901760
      %495 = vmatpush.msra.mxu0 %v494
      %v496 = vand.u32 %v224, 4294901760
      %497 = vmatmul.f32.gmra.mxu0 %v496
      %v498 = vpop.f32.mrf.mxu0
      %v499 = vadd.f32 %v475, %v498
      %500 = vdwg.mxu0
      %501 = vmatpush.msra.mxu0 0.0
      %502 = vmatpush.msra.mxu0 0.0
      %503 = vmatpush.msra.mxu0 0.0
      %504 = vmatpush.msra.mxu0 0.0
      %505 = vmatpush.msra.mxu0 0.0
      %506 = vmatpush.msra.mxu0 0.0
      %507 = vmatpush.msra.mxu0 0.0
      %508 = vmatpush.msra.mxu0 0.0
      %509 = vmatpush.msra.mxu0 0.0
      %510 = vmatpush.msra.mxu0 0.0
      %511 = vmatpush.msra.mxu0 0.0
      %512 = vmatpush.msra.mxu0 0.0
      %513 = vmatpush.msra.mxu0 0.0
      %514 = vmatpush.msra.mxu0 0.0
      %515 = vmatpush.msra.mxu0 0.0
      %v516 = vand.u32 %v229, 4294901760
      %517 = vmatpush.msra.mxu0 %v516
      %v518 = vand.u32 %v224, 4294901760
      %519 = vmatmul.f32.gmra.mxu0 %v518
      %v520 = vpop.f32.mrf.mxu0
      %v521 = vadd.f32 %v499, %v520
      %522 = vdwg.mxu0
      %v525 = vrot.slane %v521, 4
      %v526 = vsel %vm226, %v375, %v525
      %528 = vst [vmem:[%s208] sm:$0x77] %v526
      %s529 = smul.u32 2, %s19
      %p530 = scmp.lt.s32.totalorder %s18, 1
      %s531 = scalar_select %p530, %s18, 1
      %p532 = scmp.lt.s32.totalorder %s529, 1
      %s533 = scalar_select %p532, %s529, 1
      %s534 = smul.addr %s531, 2
      %s535 = sadd.s32 %s533, %s534
      %s536 = smul.addr %s535, 4
      %s537 = scalar_lea.vmem %s3, %s536
      // Predicated region
      $region33: #{out_conv_forward.1} parent=31 // pred_check
        %p538 = pneg %p116
      $region34: #{out_conv_forward.1} parent=31 // pred_check_branch
        %540 = sbr.rel (%p538) target = $region36
      $region35: #{out_conv_forward.1} parent=31 // pred_region
        %s541 = smul.u32 2, %s19
      $region36: #{out_conv_forward.1} parent=31 // pred_fallthru
        _
    $region32: #{out_conv_forward.1} parent=5 // pred_fallthru
      _
    %p542 = scmp.le.s32.totalorder 2, %s9
    // Predicated region
    $region37: #{out_conv_forward.1} parent=5 // pred_check
      %p543 = pneg %p542
    $region38: #{out_conv_forward.1} parent=5 // pred_check_branch
      %545 = sbr.rel (%p543) target = $region40
    $region39: #{out_conv_forward.1} parent=5 // pred_region
      %s546 = ssub.s32 %s9, 2
      // Predicated region
      $region41: #{out_conv_forward.1} parent=39 // pred_check
        %p547 = pneg %p122
      $region42: #{out_conv_forward.1} parent=39 // pred_check_branch
        %549 = sbr.rel (%p547) target = $region44
      $region43: #{out_conv_forward.1} parent=39 // pred_region
        %s550 = smul.u32 2, %s21
        %p551 = scmp.lt.s32.totalorder %s20, 1
        %s552 = scalar_select %p551, %s20, 1
        %p553 = scmp.lt.s32.totalorder %s550, 1
        %s554 = scalar_select %p553, %s550, 1
        %s555 = smul.addr %s552, 2
        %s556 = sadd.s32 %s554, %s555
        %s557 = smul.addr %s556, 4
        %s558 = scalar_lea.vmem %s3, %s557
      $region44: #{out_conv_forward.1} parent=39 // pred_fallthru
        _
    $region40: #{out_conv_forward.1} parent=5 // pred_fallthru
      _
  $region6: #{out_conv_forward.1} parent=0 // loop_footer
    %s13 = sadd.s32 1, %s9
  $region7: #{out_conv_forward.1} parent=0 // loop_footer_branch
    %8 = sbr.rel target = $region3
  $region8: #{out_conv_forward.1} parent=0 // loop_exit
    _

</llo_original>
